<compile_context>
chip_gen: v7x
topology: tpu7x:2x2x1
jax: 0.10.0
libtpu: 0.0.40
codegen_flags: <defaults>
</compile_context>

<pallas_src>
import functools

import jax
import jax.numpy as jnp
from jax.experimental import pallas as pl
from jax.experimental.pallas import tpu as pltpu

LANES = 128           # lane-dense last dim -> full unmasked vector stores
MAX_TILE_ROWS = 4096  # 4096*128*4 B = 2 MiB per f32 block


def _round_up(v, m):
    return ((v + m - 1) // m) * m


# ----------------------------------------------------------------------------
# Pallas kernel
# ----------------------------------------------------------------------------
def smooth_step_kernel(x_ref, o_ref, *, half_scale, half_centers, qcoeffs,
                       total, compute_dtype):
    # x_ref / o_ref: (tile_rows, 128) block of the flattened input.
    xs = x_ref[...].astype(compute_dtype) * half_scale      # hoist 0.5*scale*x
    acc = jnp.full(xs.shape, total, dtype=xs.dtype)          # sum_i (i+1)
    # TODO(synk): if max_val grows beyond ~32, switch this static unroll to a
    # partially unrolled lax.fori_loop over an SMEM table of (hc, qa).
    for hc, qa in zip(half_centers, qcoeffs):                 # static unroll
        t = jnp.tanh(xs - hc)                                 # one EUP op/center
        acc = acc - qa * (t * t)                              # VPU
    o_ref[...] = acc.astype(o_ref.dtype)


# ----------------------------------------------------------------------------
# Wrapper
# ----------------------------------------------------------------------------
def smooth_step(x, max_val, scale=10.0):
    """Pallas implementation of SmoothStepFunction(max_val, scale)(x)."""
    orig_shape = x.shape
    orig_dtype = x.dtype
    n = x.size

    half_scale = 0.5 * float(scale)
    half_centers = tuple(half_scale * (i + 0.5) for i in range(max_val))
    qcoeffs = tuple(float(i + 1) for i in range(max_val))      # 0.25 * 4*(i+1)
    total = float(sum(qcoeffs))

    # bf16 compute on bf16 inputs (v6e/v7x bf16 EUP/VPU); everything else f32.
    if orig_dtype in (jnp.float32, jnp.bfloat16):
        compute_dtype = orig_dtype
    else:
        compute_dtype = jnp.float32

    # Lane-dense (rows, 128) slab; pad only the tail up to a multiple of 128.
    rows = pl.cdiv(n, LANES)
    n_padded = rows * LANES
    x_flat = jnp.ravel(x)
    if n_padded != n:
        x_flat = jnp.pad(x_flat, (0, n_padded - n))
    x2d = x_flat.reshape(rows, LANES)

    # Tile selection: big blocks, multiple of 8 rows, >=2 tiles when possible
    # (keeps both v7x TensorCores busy).  Last block may be partial (masked).
    if rows <= 8:
        tile_rows = rows                      # block == full dim, always legal
    else:
        tile_rows = min(MAX_TILE_ROWS, _round_up(pl.cdiv(rows, 2), 8))
    grid = (pl.cdiv(rows, tile_rows),)

    kernel = functools.partial(
        smooth_step_kernel,
        half_scale=half_scale, half_centers=half_centers, qcoeffs=qcoeffs,
        total=total, compute_dtype=compute_dtype)

    out2d = pl.pallas_call(
        kernel,
        out_shape=jax.ShapeDtypeStruct((rows, LANES), orig_dtype),
        grid=grid,
        in_specs=[pl.BlockSpec((tile_rows, LANES), lambda i: (i, 0))],
        out_specs=pl.BlockSpec((tile_rows, LANES), lambda i: (i, 0)),
        compiler_params=pltpu.CompilerParams(
            dimension_semantics=("parallel",),
            vmem_limit_bytes=32 * 1024 * 1024,
        ),
    )(x2d)

    if n_padded != n:
        return out2d.reshape(-1)[:n].reshape(orig_shape)
    return out2d.reshape(orig_shape)


# ----------------------------------------------------------------------------
# Pure-JAX reference (matches the PyTorch forward)
# ----------------------------------------------------------------------------
def ref_smooth_step(x, max_val, scale=10.0):
    out = jnp.zeros_like(x)
    for i in range(max_val):
        c = i + 0.5
        a = 4.0 * (i + 1)
        s = jax.nn.sigmoid(scale * (x - c))
        out = out + a * s * (1.0 - s)
    return out


# ----------------------------------------------------------------------------
# Demo
# ----------------------------------------------------------------------------
if __name__ == "__main__":
    MAX_STEPS = 8
    SCALE = 10.0
    key = jax.random.PRNGKey(0)

    # Main case: activation-like tensor, n % 128 == 0 (no pad / no slice path).
    N, C, H, W = 2, 4, 16, 16
    k0, k1 = jax.random.split(key)
    x = jax.random.uniform(k0, (N, C, H, W), jnp.float32,
                           minval=-1.0, maxval=MAX_STEPS + 1.0)

    fwd = jax.jit(functools.partial(smooth_step, max_val=MAX_STEPS, scale=SCALE))
    out = fwd(x)
    jax.block_until_ready(out)

    ref = ref_smooth_step(x, MAX_STEPS, SCALE)
    assert out.shape == x.shape and out.dtype == x.dtype
    assert jnp.allclose(out, ref, atol=1e-5, rtol=1e-5), (
        float(jnp.max(jnp.abs(out - ref))))

    # Secondary case: odd size -> exercises tail pad + partial (masked) last
    # block, per the correctness concern in the review.
    x_odd = jax.random.uniform(k1, (3, 5, 300), jnp.float32,
                               minval=-1.0, maxval=MAX_STEPS + 1.0)
    out_odd = jax.jit(functools.partial(smooth_step, max_val=MAX_STEPS,
                                        scale=SCALE))(x_odd)
    jax.block_until_ready(out_odd)
    ref_odd = ref_smooth_step(x_odd, MAX_STEPS, SCALE)
    assert out_odd.shape == x_odd.shape
    assert jnp.allclose(out_odd, ref_odd, atol=1e-5, rtol=1e-5), (
        float(jnp.max(jnp.abs(out_odd - ref_odd))))

    print("KERNEL_OK")
</pallas_src>

<mosaic_0001>
module attributes {stable_mosaic.version = 11 : i64} {
  func.func @smooth_step_kernel(%arg0: i32, %arg1: memref<8x128xf32, #tpu.memory_space<vmem>>, %arg2: memref<8x128xf32, #tpu.memory_space<vmem>>) attributes {dimension_semantics = [#tpu.dimension_semantics<parallel>], iteration_bounds = array<i64: 2>, scalar_prefetch = 0 : i64, scratch_operands = 0 : i64, tpu.core_type = #tpu.core_type<tc>, window_params = [{transform_indices = @transform_0, window_bounds = array<i64: 8, 128>}, {transform_indices = @transform_1, window_bounds = array<i64: 8, 128>}]} {
    %c0 = arith.constant 0 : index
    %c0_0 = arith.constant 0 : index
    %0 = vector.load %arg1[%c0, %c0_0] : memref<8x128xf32, #tpu.memory_space<vmem>>, vector<8x128xf32>
    %cst = arith.constant 5.000000e+00 : f32
    %1 = vector.broadcast %cst : f32 to vector<8x128xf32>
    %2 = arith.mulf %0, %1 : vector<8x128xf32>
    %cst_1 = arith.constant 3.600000e+01 : f32
    %3 = vector.broadcast %cst_1 : f32 to vector<8x128xf32>
    %cst_2 = arith.constant 2.500000e+00 : f32
    %4 = vector.broadcast %cst_2 : f32 to vector<8x128xf32>
    %5 = arith.subf %2, %4 : vector<8x128xf32>
    %6 = math.tanh %5 : vector<8x128xf32>
    %7 = arith.mulf %6, %6 : vector<8x128xf32>
    %cst_3 = arith.constant 1.000000e+00 : f32
    %8 = vector.broadcast %cst_3 : f32 to vector<8x128xf32>
    %9 = arith.mulf %8, %7 : vector<8x128xf32>
    %10 = arith.subf %3, %9 : vector<8x128xf32>
    %cst_4 = arith.constant 7.500000e+00 : f32
    %11 = vector.broadcast %cst_4 : f32 to vector<8x128xf32>
    %12 = arith.subf %2, %11 : vector<8x128xf32>
    %13 = math.tanh %12 : vector<8x128xf32>
    %14 = arith.mulf %13, %13 : vector<8x128xf32>
    %cst_5 = arith.constant 2.000000e+00 : f32
    %15 = vector.broadcast %cst_5 : f32 to vector<8x128xf32>
    %16 = arith.mulf %15, %14 : vector<8x128xf32>
    %17 = arith.subf %10, %16 : vector<8x128xf32>
    %cst_6 = arith.constant 1.250000e+01 : f32
    %18 = vector.broadcast %cst_6 : f32 to vector<8x128xf32>
    %19 = arith.subf %2, %18 : vector<8x128xf32>
    %20 = math.tanh %19 : vector<8x128xf32>
    %21 = arith.mulf %20, %20 : vector<8x128xf32>
    %cst_7 = arith.constant 3.000000e+00 : f32
    %22 = vector.broadcast %cst_7 : f32 to vector<8x128xf32>
    %23 = arith.mulf %22, %21 : vector<8x128xf32>
    %24 = arith.subf %17, %23 : vector<8x128xf32>
    %cst_8 = arith.constant 1.750000e+01 : f32
    %25 = vector.broadcast %cst_8 : f32 to vector<8x128xf32>
    %26 = arith.subf %2, %25 : vector<8x128xf32>
    %27 = math.tanh %26 : vector<8x128xf32>
    %28 = arith.mulf %27, %27 : vector<8x128xf32>
    %cst_9 = arith.constant 4.000000e+00 : f32
    %29 = vector.broadcast %cst_9 : f32 to vector<8x128xf32>
    %30 = arith.mulf %29, %28 : vector<8x128xf32>
    %31 = arith.subf %24, %30 : vector<8x128xf32>
    %cst_10 = arith.constant 2.250000e+01 : f32
    %32 = vector.broadcast %cst_10 : f32 to vector<8x128xf32>
    %33 = arith.subf %2, %32 : vector<8x128xf32>
    %34 = math.tanh %33 : vector<8x128xf32>
    %35 = arith.mulf %34, %34 : vector<8x128xf32>
    %cst_11 = arith.constant 5.000000e+00 : f32
    %36 = vector.broadcast %cst_11 : f32 to vector<8x128xf32>
    %37 = arith.mulf %36, %35 : vector<8x128xf32>
    %38 = arith.subf %31, %37 : vector<8x128xf32>
    %cst_12 = arith.constant 2.750000e+01 : f32
    %39 = vector.broadcast %cst_12 : f32 to vector<8x128xf32>
    %40 = arith.subf %2, %39 : vector<8x128xf32>
    %41 = math.tanh %40 : vector<8x128xf32>
    %42 = arith.mulf %41, %41 : vector<8x128xf32>
    %cst_13 = arith.constant 6.000000e+00 : f32
    %43 = vector.broadcast %cst_13 : f32 to vector<8x128xf32>
    %44 = arith.mulf %43, %42 : vector<8x128xf32>
    %45 = arith.subf %38, %44 : vector<8x128xf32>
    %cst_14 = arith.constant 3.250000e+01 : f32
    %46 = vector.broadcast %cst_14 : f32 to vector<8x128xf32>
    %47 = arith.subf %2, %46 : vector<8x128xf32>
    %48 = math.tanh %47 : vector<8x128xf32>
    %49 = arith.mulf %48, %48 : vector<8x128xf32>
    %cst_15 = arith.constant 7.000000e+00 : f32
    %50 = vector.broadcast %cst_15 : f32 to vector<8x128xf32>
    %51 = arith.mulf %50, %49 : vector<8x128xf32>
    %52 = arith.subf %45, %51 : vector<8x128xf32>
    %cst_16 = arith.constant 3.750000e+01 : f32
    %53 = vector.broadcast %cst_16 : f32 to vector<8x128xf32>
    %54 = arith.subf %2, %53 : vector<8x128xf32>
    %55 = math.tanh %54 : vector<8x128xf32>
    %56 = arith.mulf %55, %55 : vector<8x128xf32>
    %cst_17 = arith.constant 8.000000e+00 : f32
    %57 = vector.broadcast %cst_17 : f32 to vector<8x128xf32>
    %58 = arith.mulf %57, %56 : vector<8x128xf32>
    %59 = arith.subf %52, %58 : vector<8x128xf32>
    %c0_18 = arith.constant 0 : index
    %c0_19 = arith.constant 0 : index
    %60 = vector.load %arg2[%c0_18, %c0_19] : memref<8x128xf32, #tpu.memory_space<vmem>>, vector<8x128xf32>
    tpu.vector_store %arg2[%c0_18, %c0_19], %59 {strides = array<i32>} : memref<8x128xf32, #tpu.memory_space<vmem>>, vector<8x128xf32>,
    return
  }
  func.func @transform_0(%arg0: i32) -> (i32, i32) {
    %c0_i32 = arith.constant 0 : i32
    %c0_i32_0 = arith.constant 0 : i32
    return %arg0, %c0_i32 : i32, i32
  }
  func.func @transform_1(%arg0: i32) -> (i32, i32) {
    %c0_i32 = arith.constant 0 : i32
    %c0_i32_0 = arith.constant 0 : i32
    return %arg0, %c0_i32 : i32, i32
  }
}

</mosaic_0001>

<llo_original>
// kernel: smooth_step.1
$region0: #{smooth_step.1}
  #allocation0 [shape = 'u32[]', space=smem, size = 0x4, offset = 0x4, fixed_abs, tag = 'smem constant byte address 0x4 - core index']
  #allocation1 [shape = 'u32[144,128]{1,0:T(1,128)}', space=vmem, size = 0x12000, scoped, tag = 'internal scratch']
  %s0 = inlined_call_operand.vmem [shape: f32[16,128], index: 0, kind: input, shape index: {}]
  %s1 = inlined_call_operand.vmem [shape: f32[16,128], index: 1, kind: output, shape index: {}]
  %s2 = sld [smem:[#allocation0]]
  $region37: #{smooth_step.1} parent=0
    _
  %s4 = ssub.s32 1, %s2
  %s5 = scalar_select 0, %s4, %s2
  loop: start=0, step=1, limit=4
  $region2: #{smooth_step.1} parent=0 // loop_pre_header
    _
  $region3: #{smooth_step.1} parent=0 // loop_header
    %s7 = sphi 0, %s11
    %p8 = scmp.ge.s32.totalorder %s7, 4
    %s17 = sphi 0, %s19
    %s20 = sphi 0, %s17
    %s21 = sphi 0, %s20
    %s37 = sphi 0, %s21
    %s43 = sphi 0, %s45
    %s46 = sphi 0, %s43
    %s47 = sphi 0, %s46
    %s63 = sphi 0, %s47
  $region4: #{smooth_step.1} parent=0 // loop_header_branch
    %10 = sbr.rel (%p8) target = $region8
  $region5: #{smooth_step.1} parent=0 // loop_body
    %s12 = ssub.s32 %s7, 1
    %s13 = ssub.s32 %s7, 2
    %s14 = sadd.s32 %s7, 1
    %s15 = ssub.s32 %s7, %s14
    %p16 = scmp.eq.s32.totalorder %s15, 0
    %s18 = sadd.s32 %s17, 1
    %s19 = scalar_select %p16, %s17, %s18
    %p22 = pneg %p16
    %p23 = scmp.eq.s32.totalorder %s7, 1
    %p24 = por %p22, %p23
    %p25 = scmp.ne.s32.totalorder %s17, %s20
    %p26 = scmp.eq.s32.totalorder %s7, 0
    %p27 = por %p25, %p26
    %p28 = scmp.ne.s32.totalorder %s17, %s20
    %p29 = scmp.eq.s32.totalorder %s12, 1
    %p30 = por %p28, %p29
    %p31 = scmp.ne.s32.totalorder %s20, %s21
    %p32 = scmp.eq.s32.totalorder %s12, 0
    %p33 = por %p31, %p32
    %p34 = scmp.ne.s32.totalorder %s20, %s21
    %p35 = scmp.eq.s32.totalorder %s13, 1
    %p36 = por %p34, %p35
    %p38 = scmp.ne.s32.totalorder %s21, %s37
    %p39 = scmp.eq.s32.totalorder %s13, 0
    %p40 = por %p38, %p39
    %s41 = ssub.s32 %s7, %s14
    %p42 = scmp.eq.s32.totalorder %s41, 0
    %s44 = sadd.s32 %s43, 1
    %s45 = scalar_select %p42, %s43, %s44
    %p48 = pneg %p42
    %p49 = scmp.eq.s32.totalorder %s7, 1
    %p50 = por %p48, %p49
    %p51 = scmp.ne.s32.totalorder %s43, %s46
    %p52 = scmp.eq.s32.totalorder %s7, 0
    %p53 = por %p51, %p52
    %p54 = scmp.ne.s32.totalorder %s43, %s46
    %p55 = scmp.eq.s32.totalorder %s12, 1
    %p56 = por %p54, %p55
    %p57 = scmp.ne.s32.totalorder %s46, %s47
    %p58 = scmp.eq.s32.totalorder %s12, 0
    %p59 = por %p57, %p58
    %p60 = scmp.ne.s32.totalorder %s46, %s47
    %p61 = scmp.eq.s32.totalorder %s13, 1
    %p62 = por %p60, %p61
    %p64 = scmp.ne.s32.totalorder %s47, %s63
    %p65 = scmp.eq.s32.totalorder %s13, 0
    %p66 = por %p64, %p65
    %p67 = scmp.le.s32.totalorder 1, %s7
    %p68 = scmp.lt.s32.totalorder %s7, 3
    %p69 = pnand %p67, %p68
    %p70 = pneg %p69
    // Predicated region
    $region9: #{smooth_step.1} parent=5 // pred_check
      _
    $region10: #{smooth_step.1} parent=5 // pred_check_branch
      %72 = sbr.rel (%p69) target = $region12
    $region11: #{smooth_step.1} parent=5 // pred_region
      %s73 = ssub.s32 %s7, 1
    $region12: #{smooth_step.1} parent=5 // pred_fallthru
      _
    %p74 = scmp.lt.s32.totalorder %s7, 2
    // Predicated region
    $region13: #{smooth_step.1} parent=5 // pred_check
      %p75 = pneg %p74
    $region14: #{smooth_step.1} parent=5 // pred_check_branch
      %77 = sbr.rel (%p75) target = $region16
    $region15: #{smooth_step.1} parent=5 // pred_region
      // Predicated region
      $region17: #{smooth_step.1} parent=15 // pred_check
        %p78 = pneg %p27
      $region18: #{smooth_step.1} parent=15 // pred_check_branch
        %80 = sbr.rel (%p78) target = $region20
      $region19: #{smooth_step.1} parent=15 // pred_region
        %p81 = scmp.lt.s32.totalorder %s7, 1
        %s82 = scalar_select %p81, %s7, 1
        %s83 = smul.addr %s82, 8
        %s84 = scalar_lea.vmem %s0, %s83
      $region20: #{smooth_step.1} parent=15 // pred_fallthru
        _
    $region16: #{smooth_step.1} parent=5 // pred_fallthru
      _
    %p85 = scmp.le.s32.totalorder 1, %s7
    %p86 = scmp.lt.s32.totalorder %s7, 3
    %p87 = pnand %p85, %p86
    %p88 = pneg %p87
    // Predicated region
    $region21: #{smooth_step.1} parent=5 // pred_check
      _
    $region22: #{smooth_step.1} parent=5 // pred_check_branch
      %90 = sbr.rel (%p87) target = $region24
    $region23: #{smooth_step.1} parent=5 // pred_region
      %s91 = ssub.s32 %s7, 1
      %p92 = scmp.lt.s32.totalorder %s12, 1
      %s93 = scalar_select %p92, %s12, 1
      %s94 = smul.addr %s93, 8
      %s95 = scalar_lea.vmem %s0, %s94
      %p96 = pneg %p33
      %p97 = pneg %p30
      %p98 = pneg %p59
      %p99 = pneg %p56
      %p100 = scmp.lt.s32.totalorder %s12, 1
      %s101 = scalar_select %p100, %s12, 1
      %s102 = smul.addr %s101, 8
      %s103 = scalar_lea.vmem %s1, %s102
      %p104 = scmp.lt.s32.totalorder %s12, 1
      %s105 = scalar_select %p104, %s12, 1
      %s106 = smul.addr %s105, 8
      %s107 = scalar_lea.vmem %s0, %s106
      %p108 = scmp.lt.s32.totalorder %s12, 1
      %s109 = scalar_select %p108, %s12, 1
      %s110 = smul.addr %s109, 8
      %s111 = scalar_lea.vmem %s1, %s110
      %v112 = vld [vmem:[%s107] sm:$0xff]
      %v113 = vmul.f32 %v112, 5.0
      %v114 = vsub.f32 %v113, 2.5
      %v115 = vtanh.pop %v114
      %v116 = vmul.f32 %v115, %v115
      %v117 = vsub.f32 36.0, %v116
      %v118 = vsub.f32 %v113, 7.5
      %v119 = vtanh.pop %v118
      %v120 = vmul.f32 %v119, %v119
      %v121 = vmul.f32 %v120, 2.0
      %v122 = vsub.f32 %v117, %v121
      %v123 = vsub.f32 %v113, 12.5
      %v124 = vtanh.pop %v123
      %v125 = vmul.f32 %v124, %v124
      %v126 = vmul.f32 %v125, 3.0
      %v127 = vsub.f32 %v122, %v126
      %v128 = vsub.f32 %v113, 17.5
      %v129 = vtanh.pop %v128
      %v130 = vmul.f32 %v129, %v129
      %v131 = vmul.f32 %v130, 4.0
      %v132 = vsub.f32 %v127, %v131
      %v133 = vsub.f32 %v113, 22.5
      %v134 = vtanh.pop %v133
      %v135 = vmul.f32 %v134, %v134
      %v136 = vmul.f32 %v135, 5.0
      %v137 = vsub.f32 %v132, %v136
      %v138 = vsub.f32 %v113, 27.5
      %v139 = vtanh.pop %v138
      %v140 = vmul.f32 %v139, %v139
      %v141 = vmul.f32 %v140, 6.0
      %v142 = vsub.f32 %v137, %v141
      %v143 = vsub.f32 %v113, 32.5
      %v144 = vtanh.pop %v143
      %v145 = vmul.f32 %v144, %v144
      %v146 = vmul.f32 %v145, 7.0
      %v147 = vsub.f32 %v142, %v146
      %v148 = vsub.f32 %v113, 37.5
      %v149 = vtanh.pop %v148
      %v150 = vmul.f32 %v149, %v149
      %v151 = vmul.f32 %v150, 8.0
      %v152 = vsub.f32 %v147, %v151
      %153 = vst [vmem:[%s111] sm:$0xff] %v152
      %p154 = scmp.lt.s32.totalorder %s12, 1
      %s155 = scalar_select %p154, %s12, 1
      %s156 = smul.addr %s155, 8
      %s157 = scalar_lea.vmem %s1, %s156
      // Predicated region
      $region25: #{smooth_step.1} parent=23 // pred_check
        %p158 = pneg %p56
      $region26: #{smooth_step.1} parent=23 // pred_check_branch
        %160 = sbr.rel (%p158) target = $region28
      $region27: #{smooth_step.1} parent=23 // pred_region
        _
      $region28: #{smooth_step.1} parent=23 // pred_fallthru
        _
    $region24: #{smooth_step.1} parent=5 // pred_fallthru
      _
    %p161 = scmp.le.s32.totalorder 2, %s7
    // Predicated region
    $region29: #{smooth_step.1} parent=5 // pred_check
      %p162 = pneg %p161
    $region30: #{smooth_step.1} parent=5 // pred_check_branch
      %164 = sbr.rel (%p162) target = $region32
    $region31: #{smooth_step.1} parent=5 // pred_region
      %s165 = ssub.s32 %s7, 2
      // Predicated region
      $region33: #{smooth_step.1} parent=31 // pred_check
        %p166 = pneg %p62
      $region34: #{smooth_step.1} parent=31 // pred_check_branch
        %168 = sbr.rel (%p166) target = $region36
      $region35: #{smooth_step.1} parent=31 // pred_region
        %p169 = scmp.lt.s32.totalorder %s13, 1
        %s170 = scalar_select %p169, %s13, 1
        %s171 = smul.addr %s170, 8
        %s172 = scalar_lea.vmem %s1, %s171
      $region36: #{smooth_step.1} parent=31 // pred_fallthru
        _
    $region32: #{smooth_step.1} parent=5 // pred_fallthru
      _
  $region6: #{smooth_step.1} parent=0 // loop_footer
    %s11 = sadd.s32 1, %s7
  $region7: #{smooth_step.1} parent=0 // loop_footer_branch
    %6 = sbr.rel target = $region3
  $region8: #{smooth_step.1} parent=0 // loop_exit
    _

</llo_original>
